<compile_context>
chip_gen: v5e
topology: v5e:2x2
jax: 0.10.0
libtpu: 0.0.40
codegen_flags: <defaults>
</compile_context>

<pallas_src>
import re
import numpy as np
import jax
import jax.numpy as jnp
from jax.experimental import pallas as pl
from jax.experimental.pallas import tpu as pltpu


def _round_up(x, m):
    return ((x + m - 1) // m) * m


# ----------------------------------------------------------------------------
# Generation-aware configuration
# ----------------------------------------------------------------------------
def _detect_tpu_generation():
    try:
        kind = jax.devices()[0].device_kind.lower()
    except Exception:
        return 0
    m = re.search(r"(\d+)", kind)
    return int(m.group(1)) if m else 0


_TPU_GEN = _detect_tpu_generation()
if _TPU_GEN in (4, 5, 6):
    _VMEM_LIMIT = 64 * 1024 * 1024      # 128 MiB physical VMEM
elif _TPU_GEN >= 7 or _TPU_GEN == 0:
    _VMEM_LIMIT = 48 * 1024 * 1024      # v7x: 64 MiB physical; safe default
else:
    _VMEM_LIMIT = 16 * 1024 * 1024      # very old generations (not a target)
_TILE_BUDGET = int(_VMEM_LIMIT * 0.75)
_TWO_CORES = _TPU_GEN >= 7              # v7x: 2 TensorCores per chip


# ----------------------------------------------------------------------------
# Tile selection
# ----------------------------------------------------------------------------
def _vmem_estimate(tm, tn, tk, k_steps, has_res):
    x = 2 * tm * tk * 2                 # x double-buffer (bf16)
    w = 2 * tk * tn * 2                 # weight double-buffer (bf16)
    o = 2 * tm * tn * 2                 # output double-buffer
    b = 2 * tn * 4                      # bias
    acc = tm * tn * 4 if k_steps > 1 else 0
    r = 2 * tm * tn * 2 if has_res else 0
    return x + w + o + b + acc + r


def _pick_tiles(M, N, K, has_res):
    Mr = max(8, _round_up(M, 8))
    Nr = _round_up(N, 128)
    # Lane-dense output tile.  Single-core chips (v5e/v6e): fewest grid steps;
    # v7x: keep tn <= 512 so the N axis can feed the second TensorCore.
    tn = min(512 if _TWO_CORES else 1024, Nr)

    def fits(tm_, tk_, ks_):
        return _vmem_estimate(tm_, tn, tk_, ks_, has_res) <= _TILE_BUDGET

    # Rows tile: as large as the VMEM budget allows (collapses the M grid for
    # the early high-M / small-K layers), capped at 1024.
    tm = min(Mr, 1024)
    while tm > 8 and not fits(tm, K, 1):
        tm = max(8, _round_up(tm // 2, 8))

    # K tile: single-shot whenever the (tk, tn) weight slab fits (no padding,
    # fewest grid steps); otherwise the fewest lane-aligned chunks that fit.
    tk, k_steps = K, 1
    if not fits(tm, K, 1):
        for s in (2, 3, 4, 6, 8, 9, 12, 16, 18, 24, 36):
            if K % s == 0 and (K // s) % 128 == 0 and fits(tm, K // s, s):
                tk, k_steps = K // s, s
                break
        else:
            tk = 512                    # generic fallback (pads K); unused here
            k_steps = pl.cdiv(K, tk)

    # v7x: try to expose >= 2 parallel blocks for the two TensorCores.
    if _TWO_CORES and pl.cdiv(M, tm) * pl.cdiv(N, tn) < 2:
        if Mr >= 16:
            tm = max(8, _round_up(pl.cdiv(Mr, 2), 8))
        elif tn >= 256:
            tn //= 2                    # stays a multiple of 128
    return tm, tn, tk, k_steps


# ----------------------------------------------------------------------------
# Pallas kernel: tiled bf16 matmul + fused bias (+ LeakyReLU) (+ residual add)
# ----------------------------------------------------------------------------
def _make_fused_kernel(leaky, has_residual, multi_k):
    def _epilogue(acc, b_ref, r_ref, o_ref):
        y = acc + b_ref[...]                      # f32 epilogue
        if leaky:
            y = jnp.where(y > 0, y, 0.1 * y)      # LeakyReLU(0.1)
        if has_residual:
            y = y + r_ref[...].astype(jnp.float32)
        o_ref[...] = y.astype(o_ref.dtype)

    if multi_k:
        def kernel(*refs):
            if has_residual:
                x_ref, w_ref, b_ref, r_ref, o_ref, acc_ref = refs
            else:
                x_ref, w_ref, b_ref, o_ref, acc_ref = refs
                r_ref = None
            k = pl.program_id(2)

            @pl.when(k == 0)
            def _():
                acc_ref[...] = jnp.zeros_like(acc_ref)

            acc_ref[...] += jnp.dot(x_ref[...], w_ref[...],
                                    preferred_element_type=jnp.float32)

            @pl.when(k == pl.num_programs(2) - 1)
            def _():
                _epilogue(acc_ref[...], b_ref, r_ref, o_ref)
    else:
        def kernel(*refs):
            if has_residual:
                x_ref, w_ref, b_ref, r_ref, o_ref = refs
            else:
                x_ref, w_ref, b_ref, o_ref = refs
                r_ref = None
            acc = jnp.dot(x_ref[...], w_ref[...],
                          preferred_element_type=jnp.float32)
            _epilogue(acc, b_ref, r_ref, o_ref)

    return kernel


def fused_matmul(x, w, bias, residual=None, leaky=True, out_dtype=jnp.bfloat16):
    """out = act(x @ w + bias) [+ residual], on the MXU in bf16 / f32-acc."""
    M, K = x.shape
    Kw, N = w.shape
    assert K == Kw

    x = x.astype(jnp.bfloat16)
    w = w.astype(jnp.bfloat16)
    bias2 = bias.reshape(1, N).astype(jnp.float32)
    has_res = residual is not None

    tm, tn, tk, _ = _pick_tiles(M, N, K, has_res)
    if K % tk:  # generic fallback; never triggered by Darknet53 shapes
        Kp = _round_up(K, tk)
        x = jnp.pad(x, ((0, 0), (0, Kp - K)))
        w = jnp.pad(w, ((0, Kp - K), (0, 0)))
        K = Kp
    k_steps = K // tk
    multi_k = k_steps > 1

    gm = pl.cdiv(M, tm)
    gn = pl.cdiv(N, tn)

    if multi_k:
        grid = (gm, gn, k_steps)
        x_spec = pl.BlockSpec((tm, tk), lambda i, j, k: (i, k))
        w_spec = pl.BlockSpec((tk, tn), lambda i, j, k: (k, j))
        b_spec = pl.BlockSpec((1, tn), lambda i, j, k: (0, j))
        r_spec = pl.BlockSpec((tm, tn), lambda i, j, k: (i, j))
        o_spec = pl.BlockSpec((tm, tn), lambda i, j, k: (i, j))
        scratch = [pltpu.VMEM((tm, tn), jnp.float32)]
        dims = ("parallel", "parallel", "arbitrary")
    else:
        grid = (gm, gn)
        x_spec = pl.BlockSpec((tm, tk), lambda i, j: (i, 0))
        w_spec = pl.BlockSpec((tk, tn), lambda i, j: (0, j))
        b_spec = pl.BlockSpec((1, tn), lambda i, j: (0, j))
        r_spec = pl.BlockSpec((tm, tn), lambda i, j: (i, j))
        o_spec = pl.BlockSpec((tm, tn), lambda i, j: (i, j))
        scratch = []
        dims = ("parallel", "parallel")

    in_specs = [x_spec, w_spec, b_spec]
    args = [x, w, bias2]
    if has_res:
        in_specs.append(r_spec)
        args.append(residual.astype(jnp.bfloat16))

    return pl.pallas_call(
        _make_fused_kernel(leaky, has_res, multi_k),
        out_shape=jax.ShapeDtypeStruct((M, N), out_dtype),
        grid_spec=pltpu.PrefetchScalarGridSpec(
            num_scalar_prefetch=0,
            grid=grid,
            in_specs=in_specs,
            out_specs=o_spec,
            scratch_shapes=scratch,
        ),
        compiler_params=pltpu.CompilerParams(
            dimension_semantics=dims,
            vmem_limit_bytes=_VMEM_LIMIT),
    )(*args)


# ----------------------------------------------------------------------------
# Fused residual-block boundary: 3x3(+bias+leaky)+residual of block k  and the
# 1x1(+bias+leaky) of block k+1, in a single pallas_call (intermediate in VMEM)
# ----------------------------------------------------------------------------
def _fused_pair_kernel(p_ref, w2_ref, b2_ref, r_ref, w1_ref, b1_ref,
                       xo_ref, ho_ref):
    acc = jnp.dot(p_ref[...], w2_ref[...], preferred_element_type=jnp.float32)
    y = acc + b2_ref[...]
    y = jnp.where(y > 0, y, 0.1 * y)                    # LeakyReLU(0.1)
    y = y + r_ref[...].astype(jnp.float32)              # residual add
    xo_ref[...] = y.astype(xo_ref.dtype)                # x_{k} -> HBM (residual of k+1)
    acc2 = jnp.dot(y.astype(jnp.bfloat16), w1_ref[...],
                   preferred_element_type=jnp.float32)  # 1x1 of block k+1
    h = acc2 + b1_ref[...]
    h = jnp.where(h > 0, h, 0.1 * h)
    ho_ref[...] = h.astype(ho_ref.dtype)


def fused_pair_matmul(patches, w2, b2, residual, w1, b1, out_dtype=jnp.bfloat16):
    """x_out = leaky(patches @ w2 + b2) + residual ; h_out = leaky(x_out @ w1 + b1).
    The whole output width stays in one N block (holds for C <= 1024)."""
    M, K1 = patches.shape
    C = w2.shape[1]
    C2 = w1.shape[1]
    assert residual.shape == (M, C) and w1.shape[0] == C

    tm = min(256, max(8, _round_up(M, 8)))
    if _TWO_CORES and pl.cdiv(M, tm) < 2 and _round_up(M, 8) >= 16:
        tm = max(8, _round_up(pl.cdiv(_round_up(M, 8), 2), 8))
    gm = pl.cdiv(M, tm)

    args = (patches.astype(jnp.bfloat16),
            w2.astype(jnp.bfloat16),
            b2.reshape(1, C).astype(jnp.float32),
            residual.astype(jnp.bfloat16),
            w1.astype(jnp.bfloat16),
            b1.reshape(1, C2).astype(jnp.float32))

    return pl.pallas_call(
        _fused_pair_kernel,
        out_shape=(jax.ShapeDtypeStruct((M, C), out_dtype),
                   jax.ShapeDtypeStruct((M, C2), out_dtype)),
        grid_spec=pltpu.PrefetchScalarGridSpec(
            num_scalar_prefetch=0,
            grid=(gm,),
            in_specs=[
                pl.BlockSpec((tm, K1), lambda i: (i, 0)),
                pl.BlockSpec((K1, C), lambda i: (0, 0)),
                pl.BlockSpec((1, C), lambda i: (0, 0)),
                pl.BlockSpec((tm, C), lambda i: (i, 0)),
                pl.BlockSpec((C, C2), lambda i: (0, 0)),
                pl.BlockSpec((1, C2), lambda i: (0, 0)),
            ],
            out_specs=[pl.BlockSpec((tm, C), lambda i: (i, 0)),
                       pl.BlockSpec((tm, C2), lambda i: (i, 0))]),
        compiler_params=pltpu.CompilerParams(
            dimension_semantics=("parallel",),
            vmem_limit_bytes=_VMEM_LIMIT),
    )(*args)


# ----------------------------------------------------------------------------
# Conv / BN / LeakyReLU building blocks (im2col glue in plain JAX)
# ----------------------------------------------------------------------------
def _im2col(x, ksize, stride, pad):
    n, h, w, c = x.shape
    ho = (h + 2 * pad - ksize) // stride + 1
    wo = (w + 2 * pad - ksize) // stride + 1
    if ksize == 1 and stride == 1 and pad == 0:
        return x.reshape(n * h * w, c), ho, wo
    xp = jnp.pad(x, ((0, 0), (pad, pad), (pad, pad), (0, 0)))
    cols = []
    for i in range(ksize):
        for j in range(ksize):
            cols.append(xp[:, i:i + stride * ho:stride,
                           j:j + stride * wo:stride, :])
    patches = jnp.concatenate(cols, axis=-1)  # (n, ho, wo, k*k*c)
    return patches.reshape(n * ho * wo, ksize * ksize * c), ho, wo


def conv_bn_leaky(x, p, ksize, stride, residual=None):
    n = x.shape[0]
    pad = (ksize - 1) // 2
    patches, ho, wo = _im2col(x, ksize, stride, pad)
    cout = p["w"].shape[1]
    res = None if residual is None else residual.reshape(-1, cout)
    y = fused_matmul(patches, p["w"], p["b"], residual=res, leaky=True)
    return y.reshape(n, ho, wo, cout)


def res_stage(x, bparams, nblocks):
    """A chain of ResBlocks sharing one channel width (physical Cp lanes)."""
    n, H, W, Cp = x.shape
    h = conv_bn_leaky(x, bparams[0], 1, 1)            # 1x1 of block 0
    prev_x = x
    for bidx in range(nblocks - 1):
        p3 = bparams[2 * bidx + 1]                    # 3x3 of block bidx
        p1n = bparams[2 * bidx + 2]                   # 1x1 of block bidx+1
        patches, _, _ = _im2col(h, 3, 1, 1)
        cout = p3["w"].shape[1]
        ch = p1n["w"].shape[1]
        x2d, h2d = fused_pair_matmul(patches, p3["w"], p3["b"],
                                     prev_x.reshape(-1, cout),
                                     p1n["w"], p1n["b"])
        prev_x = x2d.reshape(n, H, W, cout)
        h = h2d.reshape(n, H, W, ch)
    # last 3x3 + residual of the final block
    return conv_bn_leaky(h, bparams[2 * nblocks - 1], 3, 1, residual=prev_x)


# ----------------------------------------------------------------------------
# Darknet53 architecture (same structure as the PyTorch module)
# ----------------------------------------------------------------------------
STAGES = [
    ("conv", 3, 32, 3, 1),
    ("conv", 32, 64, 3, 2),
    ("res", 64, 1),
    ("conv", 64, 128, 3, 2),
    ("res", 128, 2),
    ("conv", 128, 256, 3, 2),
    ("res", 256, 8),
    ("conv", 256, 512, 3, 2),
    ("res", 512, 8),
    ("conv", 512, 1024, 3, 2),
    ("res", 1024, 4),
]

_LANE = 128


def _xavier(key, fan_in, fan_out, shape):
    lim = float(np.sqrt(6.0 / (fan_in + fan_out)))
    return jax.random.uniform(key, shape, jnp.float32, -lim, lim)


def _conv_bn_params(key, cin, cout, ksize, phys_cin, phys_cout):
    """Conv weight stored matmul-ready as (k*k*phys_cin, phys_cout) in
    (kh, kw, cin) row order.  Channels beyond the logical cin/cout are zero,
    so padded lanes stay exactly zero through the network (padding absorbed
    into the next layer's K rows).  BatchNorm (inference stats) folded in."""
    w_log = _xavier(key, ksize * ksize * cin, ksize * ksize * cout,
                    (ksize, ksize, cin, cout))
    w = jnp.zeros((ksize, ksize, phys_cin, phys_cout), jnp.float32)
    w = w.at[:, :, :cin, :cout].set(w_log)

    gamma = jnp.ones((cout,), jnp.float32)
    beta = jnp.zeros((cout,), jnp.float32)
    mean = jnp.zeros((cout,), jnp.float32)
    var = jnp.ones((cout,), jnp.float32)
    eps = 1e-5
    scale_log = gamma / jnp.sqrt(var + eps)
    bias_log = beta - mean * scale_log
    scale = jnp.zeros((phys_cout,), jnp.float32).at[:cout].set(scale_log)
    bias = jnp.zeros((phys_cout,), jnp.float32).at[:cout].set(bias_log)

    w2d = (w.reshape(ksize * ksize * phys_cin, phys_cout) * scale[None, :])
    return {"w": w2d.astype(jnp.bfloat16), "b": bias.astype(jnp.float32)}


def build_params(key, num_classes):
    convs = []
    phys_c = 3  # the input image is not channel-padded
    for spec in STAGES:
        if spec[0] == "conv":
            _, cin, cout, k, _s = spec
            pco = max(cout, _LANE)
            key, sub = jax.random.split(key)
            convs.append(_conv_bn_params(sub, cin, cout, k, phys_c, pco))
            phys_c = pco
        else:
            _, c, nblocks = spec
            pc = phys_c
            pmid = max(c // 2, _LANE)
            for _ in range(nblocks):
                key, k1, k2 = jax.random.split(key, 3)
                convs.append(_conv_bn_params(k1, c, c // 2, 1, pc, pmid))
                convs.append(_conv_bn_params(k2, c // 2, c, 3, pmid, pc))
    key, kw, kb = jax.random.split(key, 3)
    fc_w = _xavier(kw, 1024, num_classes, (1024, num_classes))
    lim = float(1.0 / np.sqrt(1024))
    fc_b = jax.random.uniform(kb, (num_classes,), jnp.float32, -lim, lim)
    return {"convs": convs,
            "fc_w": fc_w.astype(jnp.bfloat16),
            "fc_b": fc_b}


def darknet53_forward(params, x_nchw):
    # bf16 activations end-to-end; accumulation/epilogue stay f32 in-kernel.
    # NOTE: batch=2 keeps every deep layer weight-streaming-bound; a larger
    # batch (>=32) is the single biggest end-to-end lever on any generation.
    x = jnp.transpose(x_nchw, (0, 2, 3, 1)).astype(jnp.bfloat16)  # NCHW->NHWC
    convs = params["convs"]
    idx = 0
    for spec in STAGES:
        if spec[0] == "conv":
            _, _cin, _cout, k, s = spec
            x = conv_bn_leaky(x, convs[idx], k, s)
            idx += 1
        else:
            _, _c, nblocks = spec
            x = res_stage(x, convs[idx: idx + 2 * nblocks], nblocks)
            idx += 2 * nblocks
    # Global average pool (tiny reduction kept in JAX), then FC in Pallas.
    g = jnp.mean(x.astype(jnp.float32), axis=(1, 2))  # (N, 1024)
    logits = fused_matmul(g, params["fc_w"], params["fc_b"], leaky=False,
                          out_dtype=jnp.float32)
    return logits


if __name__ == "__main__":
    key = jax.random.PRNGKey(0)
    kp, kx, ka, kb, kr, t1, t2, t3, t4 = jax.random.split(key, 9)

    num_classes = 1000
    params = build_params(kp, num_classes)

    # Small shapes consistent with the module: batch=2, 3 channels, 32x32.
    x = jax.random.normal(kx, (2, 3, 32, 32), jnp.float32)

    # --- numerical sanity check of the fused matmul kernel ---
    a = jax.random.normal(ka, (40, 70), jnp.float32)
    b = jax.random.normal(kb, (70, 200), jnp.float32)
    r = jax.random.normal(kr, (40, 200), jnp.float32)
    bias = jnp.linspace(-0.1, 0.1, 200, dtype=jnp.float32)
    got = jax.block_until_ready(
        fused_matmul(a, b, bias, residual=r, leaky=True, out_dtype=jnp.float32))
    _b16 = lambda v: v.astype(jnp.bfloat16).astype(jnp.float32)
    ref = _b16(a) @ _b16(b) + bias
    ref = jnp.where(ref > 0, ref, 0.1 * ref) + _b16(r)
    np.testing.assert_allclose(np.asarray(got), np.asarray(ref),
                               rtol=2e-2, atol=2e-2)

    # --- numerical sanity check of the fused residual-boundary kernel ---
    M, K1, C, C2 = 16, 256, 128, 128
    p_ = jax.random.normal(t1, (M, K1), jnp.float32)
    w2_ = jax.random.normal(t2, (K1, C), jnp.float32) * 0.05
    b2_ = jnp.linspace(-0.05, 0.05, C, dtype=jnp.float32)
    rs_ = jax.random.normal(t3, (M, C), jnp.float32)
    w1_ = jax.random.normal(t4, (C, C2), jnp.float32) * 0.05
    b1_ = jnp.linspace(-0.05, 0.05, C2, dtype=jnp.float32)
    gx, gh = fused_pair_matmul(p_, w2_, b2_, rs_, w1_, b1_)
    gx = np.asarray(jax.block_until_ready(gx)).astype(np.float32)
    gh = np.asarray(jax.block_until_ready(gh)).astype(np.float32)
    tref = _b16(p_) @ _b16(w2_) + b2_
    tref = jnp.where(tref > 0, tref, 0.1 * tref) + _b16(rs_)
    href = _b16(tref) @ _b16(w1_) + b1_
    href = jnp.where(href > 0, href, 0.1 * href)
    np.testing.assert_allclose(gx, np.asarray(tref), rtol=3e-2, atol=3e-2)
    np.testing.assert_allclose(gh, np.asarray(href), rtol=3e-2, atol=3e-2)

    fwd = jax.jit(darknet53_forward)
    out = jax.block_until_ready(fwd(params, x))
    assert out.shape == (2, num_classes), out.shape
    assert bool(jnp.all(jnp.isfinite(out)))
    print("KERNEL_OK")
</pallas_src>

<mosaic_0001>
module attributes {stable_mosaic.version = 11 : i64} {
  func.func @kernel(%arg0: i32, %arg1: i32, %arg2: memref<40x70xbf16, #tpu.memory_space<vmem>>, %arg3: memref<70x256xbf16, #tpu.memory_space<vmem>>, %arg4: memref<1x256xf32, #tpu.memory_space<vmem>>, %arg5: memref<40x256xbf16, #tpu.memory_space<vmem>>, %arg6: memref<40x256xf32, #tpu.memory_space<vmem>>) attributes {dimension_semantics = [#tpu.dimension_semantics<parallel>, #tpu.dimension_semantics<parallel>], iteration_bounds = array<i64: 1, 1>, scalar_prefetch = 0 : i64, scratch_operands = 0 : i64, tpu.core_type = #tpu.core_type<tc>, window_params = [{transform_indices = @transform_0, window_bounds = array<i64: 40, 70>}, {transform_indices = @transform_1, window_bounds = array<i64: 70, 256>}, {transform_indices = @transform_2, window_bounds = array<i64: 1, 256>}, {transform_indices = @transform_3, window_bounds = array<i64: 40, 256>}, {transform_indices = @transform_4, window_bounds = array<i64: 40, 256>}]} {
    %c0 = arith.constant 0 : index
    %c0_0 = arith.constant 0 : index
    %0 = vector.load %arg2[%c0, %c0_0] : memref<40x70xbf16, #tpu.memory_space<vmem>>, vector<40x70xbf16>
    %c0_1 = arith.constant 0 : index
    %c0_2 = arith.constant 0 : index
    %1 = vector.load %arg3[%c0_1, %c0_2] : memref<70x256xbf16, #tpu.memory_space<vmem>>, vector<70x256xbf16>
    %cst = arith.constant dense<0.000000e+00> : vector<40x256xf32>
    %2 = tpu.matmul %0, %1, %cst {dimension_numbers = #tpu.dot_dimension_numbers<[1], [0], [0], [1], [0, 0, 1, 1], [], []>} : vector<40x70xbf16>, vector<70x256xbf16>, vector<40x256xf32> -> vector<40x256xf32>
    %c0_3 = arith.constant 0 : index
    %c0_4 = arith.constant 0 : index
    %3 = vector.load %arg4[%c0_3, %c0_4] : memref<1x256xf32, #tpu.memory_space<vmem>>, vector<1x256xf32>
    %4 = vector.broadcast %3 : vector<1x256xf32> to vector<40x256xf32>
    %5 = arith.addf %2, %4 : vector<40x256xf32>
    %cst_5 = arith.constant 0.000000e+00 : f32
    %6 = vector.broadcast %cst_5 : f32 to vector<40x256xf32>
    %7 = arith.cmpf ogt, %5, %6 : vector<40x256xf32>
    %cst_6 = arith.constant 1.000000e-01 : f32
    %8 = vector.broadcast %cst_6 : f32 to vector<40x256xf32>
    %9 = arith.mulf %8, %5 : vector<40x256xf32>
    %10 = arith.select %7, %5, %9 : vector<40x256xi1>, vector<40x256xf32>
    %c0_7 = arith.constant 0 : index
    %c0_8 = arith.constant 0 : index
    %11 = vector.load %arg5[%c0_7, %c0_8] : memref<40x256xbf16, #tpu.memory_space<vmem>>, vector<40x256xbf16>
    %12 = arith.extf %11 : vector<40x256xbf16> to vector<40x256xf32>
    %13 = arith.addf %10, %12 : vector<40x256xf32>
    %c0_9 = arith.constant 0 : index
    %c0_10 = arith.constant 0 : index
    %14 = vector.load %arg6[%c0_9, %c0_10] : memref<40x256xf32, #tpu.memory_space<vmem>>, vector<40x256xf32>
    tpu.vector_store %arg6[%c0_9, %c0_10], %13 {strides = array<i32>} : memref<40x256xf32, #tpu.memory_space<vmem>>, vector<40x256xf32>,
    return
  }
  func.func @transform_0(%arg0: i32, %arg1: i32) -> (i32, i32) {
    %c0_i32 = arith.constant 0 : i32
    %c0_i32_0 = arith.constant 0 : i32
    return %arg0, %c0_i32 : i32, i32
  }
  func.func @transform_1(%arg0: i32, %arg1: i32) -> (i32, i32) {
    %c0_i32 = arith.constant 0 : i32
    %c0_i32_0 = arith.constant 0 : i32
    return %c0_i32, %arg1 : i32, i32
  }
  func.func @transform_2(%arg0: i32, %arg1: i32) -> (i32, i32) {
    %c0_i32 = arith.constant 0 : i32
    %c0_i32_0 = arith.constant 0 : i32
    return %c0_i32, %arg1 : i32, i32
  }
  func.func @transform_3(%arg0: i32, %arg1: i32) -> (i32, i32) {
    %c0_i32 = arith.constant 0 : i32
    return %arg0, %arg1 : i32, i32
  }
  func.func @transform_4(%arg0: i32, %arg1: i32) -> (i32, i32) {
    %c0_i32 = arith.constant 0 : i32
    return %arg0, %arg1 : i32, i32
  }
}

</mosaic_0001>

<llo_original>
// kernel: tpu_custom_call.1
$region0: #{tpu_custom_call.1}
  #allocation0 [shape = 'u32[]', space=smem, size = 0x4, offset = 0x4, fixed_abs, tag = 'smem constant byte address 0x4 - core index']
  #allocation1 [shape = 'u32[72,128]{1,0:T(1,128)}', space=vmem, size = 0x9000, scoped, tag = 'internal scratch']
  %s0 = inlined_call_operand.hbm [shape: bf16[40,70], index: 0, kind: input, shape index: {}]
  %s1 = inlined_call_operand.hbm [shape: bf16[70,200], index: 1, kind: input, shape index: {}]
  %s2 = inlined_call_operand.hbm [shape: f32[1,200], index: 2, kind: input, shape index: {}]
  %s3 = inlined_call_operand.hbm [shape: bf16[40,200], index: 3, kind: input, shape index: {}]
  %s4 = inlined_call_operand.hbm [shape: f32[40,200], index: 4, kind: output, shape index: {}]
  %s5 = sld [smem:[#allocation0]]
  $region42: #{tpu_custom_call.1} parent=0
    _
  %s7 = ssub.s32 1, %s5
  %s8 = scalar_select 0, %s7, %s5
  $region1: #{tpu_custom_call.1} parent=0
    #allocation2 [shape = 'u8[10240]{0}', space=vmem, size = 0x2800, scoped, tag = 'input window, operand 0, single buffered']
    #allocation3 [shape = 's32[1]{0}', space=sflag, size = 0x4, scoped, tag = 'scoped memory for tpu_custom_call.1']
    #allocation4 [shape = 's32[1]{0}', space=sflag, size = 0x4, scoped, tag = 'scoped memory for tpu_custom_call.1']
    #allocation5 [shape = 'u8[36864]{0}', space=vmem, size = 0x9000, scoped, tag = 'input window, operand 1, single buffered']
    #allocation6 [shape = 's32[1]{0}', space=sflag, size = 0x4, scoped, tag = 'scoped memory for tpu_custom_call.1']
    #allocation7 [shape = 'u8[1024]{0}', space=vmem, size = 0x400, scoped, tag = 'input window, operand 2, single buffered']
    #allocation8 [shape = 'u8[20480]{0}', space=vmem, size = 0x5000, scoped, tag = 'input window, operand 3, single buffered']
    #allocation9 [shape = 's32[1]{0}', space=sflag, size = 0x4, scoped, tag = 'scoped memory for tpu_custom_call.1']
    #allocation10 [shape = 'u8[40960]{0}', space=vmem, size = 0xa000, scoped, tag = 'output window, operand 0, single buffered']
    %9 = vsyncpa [#allocation3], 0
    %10 = vsyncpa [#allocation6], 0
    %11 = vsyncpa [#allocation9], 0
    %12 = vsyncpa [#allocation4], 0
    // Predicated region
    $region2: #{tpu_custom_call.1} parent=1 // pred_check
      _
    $region3: #{tpu_custom_call.1} parent=1 // pred_check_branch
      %14 = sbr.rel (0) target = $region5
    $region4: #{tpu_custom_call.1} parent=1 // pred_region
      %16 = vsyncadd [#allocation3], 0
      %s17 = sshll.u32 %s0, 4
      %s18 = int_to_ptr.hbm [resolvable:$true] %s17
      %s19 = sshll.u32 [#allocation2], 4
      %s20 = int_to_ptr.vmem [resolvable:$true] %s19
      %25 = dma.hbm_to_vmem [thread:$0]  %s18, 320, %s20, [#allocation3], 64, 64, 4
    $region5: #{tpu_custom_call.1} parent=1 // pred_fallthru
      _
    // Predicated region
    $region6: #{tpu_custom_call.1} parent=1 // pred_check
      _
    $region7: #{tpu_custom_call.1} parent=1 // pred_check_branch
      %27 = sbr.rel (0) target = $region9
    $region8: #{tpu_custom_call.1} parent=1 // pred_region
      %29 = vsyncadd [#allocation6], 0
      %s30 = sshll.u32 %s1, 4
      %s31 = int_to_ptr.hbm [resolvable:$true] %s30
      %s32 = sshll.u32 [#allocation5], 4
      %s33 = int_to_ptr.vmem [resolvable:$true] %s32
      %38 = dma.hbm_to_vmem [thread:$0]  %s31, 1152, %s33, [#allocation6], 128, 128, 8
    $region9: #{tpu_custom_call.1} parent=1 // pred_fallthru
      _
    // Predicated region
    $region10: #{tpu_custom_call.1} parent=1 // pred_check
      _
    $region11: #{tpu_custom_call.1} parent=1 // pred_check_branch
      %40 = sbr.rel (0) target = $region13
    $region12: #{tpu_custom_call.1} parent=1 // pred_region
      %42 = vsyncadd [#allocation6], 0
      %s44 = sshll.u32 %s2, 4
      %s45 = int_to_ptr.hbm [resolvable:$true] %s44
      %s46 = sshll.u32 [#allocation7], 4
      %s47 = int_to_ptr.vmem [resolvable:$true] %s46
      %49 = dma.hbm_to_vmem [thread:$0]  %s45, 32, %s47, [#allocation6]
    $region13: #{tpu_custom_call.1} parent=1 // pred_fallthru
      _
    // Predicated region
    $region14: #{tpu_custom_call.1} parent=1 // pred_check
      _
    $region15: #{tpu_custom_call.1} parent=1 // pred_check_branch
      %51 = sbr.rel (0) target = $region17
    $region16: #{tpu_custom_call.1} parent=1 // pred_region
      %53 = vsyncadd [#allocation9], 0
      %s54 = sshll.u32 %s3, 4
      %s55 = int_to_ptr.hbm [resolvable:$true] %s54
      %s56 = sshll.u32 [#allocation8], 4
      %s57 = int_to_ptr.vmem [resolvable:$true] %s56
      %62 = dma.hbm_to_vmem [thread:$0]  %s55, 640, %s57, [#allocation9], 128, 128, 8
    $region17: #{tpu_custom_call.1} parent=1 // pred_fallthru
      _
    // Predicated region
    $region18: #{tpu_custom_call.1} parent=1 // pred_check
      _
    $region19: #{tpu_custom_call.1} parent=1 // pred_check_branch
      %64 = sbr.rel (0) target = $region21
    $region20: #{tpu_custom_call.1} parent=1 // pred_region
      %66 = dma.done [#allocation3], 320
    $region21: #{tpu_custom_call.1} parent=1 // pred_fallthru
      _
    // Predicated region
    $region22: #{tpu_custom_call.1} parent=1 // pred_check
      _
    $region23: #{tpu_custom_call.1} parent=1 // pred_check_branch
      %68 = sbr.rel (0) target = $region25
    $region24: #{tpu_custom_call.1} parent=1 // pred_region
      %70 = dma.done [#allocation6], 1152
    $region25: #{tpu_custom_call.1} parent=1 // pred_fallthru
      _
    // Predicated region
    $region26: #{tpu_custom_call.1} parent=1 // pred_check
      _
    $region27: #{tpu_custom_call.1} parent=1 // pred_check_branch
      %72 = sbr.rel (0) target = $region29
    $region28: #{tpu_custom_call.1} parent=1 // pred_region
      %74 = dma.done [#allocation6], 32
    $region29: #{tpu_custom_call.1} parent=1 // pred_fallthru
      _
    // Predicated region
    $region30: #{tpu_custom_call.1} parent=1 // pred_check
      _
    $region31: #{tpu_custom_call.1} parent=1 // pred_check_branch
      %76 = sbr.rel (0) target = $region33
    $region32: #{tpu_custom_call.1} parent=1 // pred_region
      %78 = dma.done [#allocation9], 640
    $region33: #{tpu_custom_call.1} parent=1 // pred_fallthru
      _
    %v80 = vld [vmem:[#allocation2] sm:$0xf]
    %v81 = vld [vmem:[#allocation2 + $0x4] sm:$0xf]
    %v82 = vld [vmem:[#allocation2 + $0x8] sm:$0xf]
    %v83 = vld [vmem:[#allocation2 + $0xc] sm:$0xf]
    %v84 = vld [vmem:[#allocation2 + $0x10] sm:$0xf]
    %v85 = vld [vmem:[#allocation5] sm:$0xff]
    %v86 = vld [vmem:[#allocation5 + $0x8] sm:$0xff]
    %v87 = vld [vmem:[#allocation5 + $0x10] sm:$0xff]
    %v88 = vld [vmem:[#allocation5 + $0x18] sm:$0xff]
    %v89 = vld [vmem:[#allocation5 + $0x20] sm:$0xff]
    %v90 = vld [vmem:[#allocation5 + $0x28] sm:$0xff]
    %v91 = vld [vmem:[#allocation5 + $0x30] sm:$0xff]
    %v92 = vld [vmem:[#allocation5 + $0x38] sm:$0xff]
    %v93 = vld [vmem:[#allocation5 + $0x40] sm:$0x77]
    %v94 = vld [vmem:[#allocation7] sm:$0x3]
    %v96 = vperm.slane %v94, 0
    %v97 = vperm.slane %v94, 1
    %v105 = vunpack.c.l.b16 %v80
    %v106 = vunpack.c.l.b16 %v81
    %v107 = vunpack.c.l.b16 %v82
    %v108 = vunpack.c.l.b16 %v83
    %v109 = vunpack.c.l.b16 %v84
    %v110 = vpack.c.b16 %v106, %v105
    %v111 = vpack.c.b16 %v108, %v107
    %v112 = vpack.c.b16 %v109, %v109
    %v122 = vunpack.c.l.b16 %v85
    %v123 = vunpack.c.h.b16 %v85
    %v124 = vunpack.c.l.b16 %v86
    %v125 = vunpack.c.h.b16 %v86
    %v126 = vunpack.c.l.b16 %v87
    %v127 = vunpack.c.h.b16 %v87
    %v128 = vunpack.c.l.b16 %v88
    %v129 = vunpack.c.h.b16 %v88
    %v130 = vunpack.c.l.b16 %v89
    %v131 = vunpack.c.h.b16 %v89
    %v132 = vunpack.c.l.b16 %v90
    %v133 = vunpack.c.h.b16 %v90
    %v134 = vunpack.c.l.b16 %v91
    %v135 = vunpack.c.h.b16 %v91
    %v136 = vunpack.c.l.b16 %v92
    %v137 = vunpack.c.h.b16 %v92
    %v138 = vunpack.c.l.b16 %v93
    %v139 = vunpack.c.h.b16 %v93
    %v140 = vpack.c.b16 %v124, %v122
    %v141 = vpack.c.b16 %v125, %v123
    %v142 = vpack.c.b16 %v128, %v126
    %v143 = vpack.c.b16 %v129, %v127
    %v144 = vpack.c.b16 %v132, %v130
    %v145 = vpack.c.b16 %v133, %v131
    %v146 = vpack.c.b16 %v136, %v134
    %v147 = vpack.c.b16 %v137, %v135
    %v148 = vpack.c.b16 %v138, %v138
    %v149 = vpack.c.b16 %v139, %v139
    %vm158 = vcmask 572416
    %v160 = vsel %vm158, %v110, 0
    %v163 = vsel %vm158, %v111, 0
    %v166 = vsel %vm158, %v112, 0
    %vm168 = vcmask 1042432
    %v170 = vsel %vm168, %v148, 0
    %v173 = vsel %vm168, %v149, 0
    %175 = vmatpush.bf16.msra.mxu0 0
    %176 = vmatpush.bf16.msra.mxu0 0
    %177 = vmatpush.bf16.msra.mxu0 0
    %178 = vmatpush.bf16.msra.mxu0 %v170
    %179 = vmatpush.bf16.msra.mxu0 %v146
    %180 = vmatpush.bf16.msra.mxu0 %v144
    %181 = vmatpush.bf16.msra.mxu0 %v142
    %182 = vmatpush.bf16.msra.mxu0 %v140
    %183 = vmatmul.bf16.gmra.mxu0 %v160
    %v184 = vpop.f32.mrf.mxu0
    %v185 = vadd.f32 %v96, %v184
    %v186 = vpop.f32.mrf.mxu0
    %v187 = vadd.f32 %v96, %v186
    %188 = vmatmul.bf16.gmra.mxu0 %v163
    %v189 = vpop.f32.mrf.mxu0
    %v190 = vadd.f32 %v96, %v189
    %v191 = vpop.f32.mrf.mxu0
    %v192 = vadd.f32 %v96, %v191
    %193 = vmatmul.bf16.gmra.mxu0 %v166
    %v194 = vpop.f32.mrf.mxu0
    %v195 = vadd.f32 %v96, %v194
    %v196 = vpop.f32.mrf.mxu0
    %197 = vdwg.mxu0
    %198 = vmatpush.bf16.msra.mxu0 0
    %199 = vmatpush.bf16.msra.mxu0 0
    %200 = vmatpush.bf16.msra.mxu0 0
    %201 = vmatpush.bf16.msra.mxu0 %v173
    %202 = vmatpush.bf16.msra.mxu0 %v147
    %203 = vmatpush.bf16.msra.mxu0 %v145
    %204 = vmatpush.bf16.msra.mxu0 %v143
    %205 = vmatpush.bf16.msra.mxu0 %v141
    %206 = vmatmul.bf16.gmra.mxu0 %v160
    %v207 = vpop.f32.mrf.mxu0
    %v208 = vadd.f32 %v97, %v207
    %v209 = vpop.f32.mrf.mxu0
    %v210 = vadd.f32 %v97, %v209
    %211 = vmatmul.bf16.gmra.mxu0 %v163
    %v212 = vpop.f32.mrf.mxu0
    %v213 = vadd.f32 %v97, %v212
    %v214 = vpop.f32.mrf.mxu0
    %v215 = vadd.f32 %v97, %v214
    %216 = vmatmul.bf16.gmra.mxu0 %v166
    %v217 = vpop.f32.mrf.mxu0
    %v218 = vadd.f32 %v97, %v217
    %v219 = vpop.f32.mrf.mxu0
    %220 = vdwg.mxu0
    %vm221 = vcmp.gt.f32.partialorder %v185, 0.0
    %vm222 = vcmp.gt.f32.partialorder %v208, 0.0
    %vm223 = vcmp.gt.f32.partialorder %v187, 0.0
    %vm224 = vcmp.gt.f32.partialorder %v210, 0.0
    %vm225 = vcmp.gt.f32.partialorder %v190, 0.0
    %vm226 = vcmp.gt.f32.partialorder %v213, 0.0
    %vm227 = vcmp.gt.f32.partialorder %v192, 0.0
    %vm228 = vcmp.gt.f32.partialorder %v215, 0.0
    %vm229 = vcmp.gt.f32.partialorder %v195, 0.0
    %vm230 = vcmp.gt.f32.partialorder %v218, 0.0
    %v231 = vmul.f32 %v185, 0.1
    %v232 = vmul.f32 %v208, 0.1
    %v233 = vmul.f32 %v187, 0.1
    %v234 = vmul.f32 %v210, 0.1
    %v235 = vmul.f32 %v190, 0.1
    %v236 = vmul.f32 %v213, 0.1
    %v237 = vmul.f32 %v192, 0.1
    %v238 = vmul.f32 %v215, 0.1
    %v239 = vmul.f32 %v195, 0.1
    %v240 = vmul.f32 %v218, 0.1
    %v241 = vsel %vm221, %v185, %v231
    %v242 = vsel %vm222, %v208, %v232
    %v243 = vsel %vm223, %v187, %v233
    %v244 = vsel %vm224, %v210, %v234
    %v245 = vsel %vm225, %v190, %v235
    %v246 = vsel %vm226, %v213, %v236
    %v247 = vsel %vm227, %v192, %v237
    %v248 = vsel %vm228, %v215, %v238
    %v249 = vsel %vm229, %v195, %v239
    %v250 = vsel %vm230, %v218, %v240
    %v251 = vld [vmem:[#allocation8] sm:$0xff]
    %v252 = vld [vmem:[#allocation8 + $0x8] sm:$0xff]
    %v253 = vld [vmem:[#allocation8 + $0x10] sm:$0xff]
    %v254 = vld [vmem:[#allocation8 + $0x18] sm:$0xff]
    %v255 = vld [vmem:[#allocation8 + $0x20] sm:$0xff]
    %v256 = vunpack.c.l.bf16 %v251
    %v257 = vunpack.c.h.bf16 %v251
    %v258 = vunpack.c.l.bf16 %v252
    %v259 = vunpack.c.h.bf16 %v252
    %v260 = vunpack.c.l.bf16 %v253
    %v261 = vunpack.c.h.bf16 %v253
    %v262 = vunpack.c.l.bf16 %v254
    %v263 = vunpack.c.h.bf16 %v254
    %v264 = vunpack.c.l.bf16 %v255
    %v265 = vunpack.c.h.bf16 %v255
    %v266 = vadd.f32 %v241, %v256
    %v267 = vadd.f32 %v242, %v257
    %v268 = vadd.f32 %v243, %v258
    %v269 = vadd.f32 %v244, %v259
    %v270 = vadd.f32 %v245, %v260
    %v271 = vadd.f32 %v246, %v261
    %v272 = vadd.f32 %v247, %v262
    %v273 = vadd.f32 %v248, %v263
    %v274 = vadd.f32 %v249, %v264
    %v275 = vadd.f32 %v250, %v265
    %276 = vst [vmem:[#allocation10] sm:$0xff] %v266
    %277 = vst [vmem:[#allocation10 + $0x8] sm:$0xff] %v267
    %278 = vst [vmem:[#allocation10 + $0x10] sm:$0xff] %v268
    %279 = vst [vmem:[#allocation10 + $0x18] sm:$0xff] %v269
    %280 = vst [vmem:[#allocation10 + $0x20] sm:$0xff] %v270
    %281 = vst [vmem:[#allocation10 + $0x28] sm:$0xff] %v271
    %282 = vst [vmem:[#allocation10 + $0x30] sm:$0xff] %v272
    %283 = vst [vmem:[#allocation10 + $0x38] sm:$0xff] %v273
    %284 = vst [vmem:[#allocation10 + $0x40] sm:$0xff] %v274
    %285 = vst [vmem:[#allocation10 + $0x48] sm:$0xff] %v275
    // Predicated region
    $region34: #{tpu_custom_call.1} parent=1 // pred_check
      _
    $region35: #{tpu_custom_call.1} parent=1 // pred_check_branch
      %287 = sbr.rel (0) target = $region37
    $region36: #{tpu_custom_call.1} parent=1 // pred_region
      %289 = vsyncadd [#allocation4], 0
      %s290 = sshll.u32 [#allocation10], 4
      %s291 = int_to_ptr.vmem [resolvable:$true] %s290
      %s292 = sshll.u32 %s4, 4
      %s293 = int_to_ptr.hbm [resolvable:$true] %s292
      %298 = dma.vmem_to_hbm [thread:$0]  %s291, 1280, %s293, [#allocation4], 256, 256, 16
    $region37: #{tpu_custom_call.1} parent=1 // pred_fallthru
      _
    // Predicated region
    $region38: #{tpu_custom_call.1} parent=1 // pred_check
      _
    $region39: #{tpu_custom_call.1} parent=1 // pred_check_branch
      %300 = sbr.rel (0) target = $region41
    $region40: #{tpu_custom_call.1} parent=1 // pred_region
      %302 = dma.done [#allocation4], 1280
    $region41: #{tpu_custom_call.1} parent=1 // pred_fallthru
      _
    %303 = vsyncpa [#allocation3], 1
    %304 = vsyncpa [#allocation6], 1
    %305 = vsyncpa [#allocation9], 1
    %306 = vsyncpa [#allocation4], 1

</llo_original>
